<compile_context>
chip_gen: v6e
topology: v6e:2x2x1
jax: 0.10.0
libtpu: 0.0.40
codegen_flags: <defaults>
</compile_context>

<pallas_src>
import jax
import jax.numpy as jnp
from jax.experimental import pallas as pl
from jax.experimental.pallas import tpu as pltpu

_LANE = 128  # vreg lane width


def _swish_kernel(x_ref, o_ref):
    x = x_ref[...].astype(jnp.float32)          # VPU mul + EUP exp/recip
    o_ref[...] = (x * jax.nn.sigmoid(x)).astype(o_ref.dtype)


def _sublane_for(dtype):
    """Packed sublane tile height: 8 (f32), 16 (bf16/f16), 32 (int8/fp8)."""
    itemsize = jnp.dtype(dtype).itemsize
    return max(8, 32 // max(1, itemsize))


def _tile_bytes_for_device():
    """Per-generation tile-size target (fits default scoped VMEM with 2x buffering of in+out)."""
    kind = ""
    try:
        kind = jax.devices()[0].device_kind.lower()
    except Exception:
        pass
    if "v5 lite" in kind or "v5lite" in kind or "v5e" in kind:
        return 2 * 1024 * 1024   # v5e: 16 MiB scoped default -> 4x2 MiB = 8 MiB
    if "v6" in kind:
        return 6 * 1024 * 1024   # v6e: 32 MiB scoped default -> 24 MiB
    if "v7" in kind:
        return 4 * 1024 * 1024   # v7x: 64 MiB physical VMEM, leave headroom
    return 2 * 1024 * 1024       # conservative fallback (v4 / unknown)


def swish(x, *, block_rows=None):
    """Elementwise x * sigmoid(x) via a single lane-dense Pallas kernel."""
    orig_shape, orig_dtype = x.shape, x.dtype
    n = x.size
    if n == 0:
        return x

    sublane = _sublane_for(orig_dtype)
    itemsize = jnp.dtype(orig_dtype).itemsize

    if block_rows is None:
        block_rows = _tile_bytes_for_device() // (_LANE * itemsize)
    block_rows = max(sublane, (block_rows // sublane) * sublane)

    # Lane-dense slab: (rows, 128). Pad only up to the next multiple of 128
    # lanes (free when n % 128 == 0 -> pure bitcast reshape).
    rows = pl.cdiv(n, _LANE)
    padded_n = rows * _LANE

    flat = x.reshape(-1)
    if padded_n != n:
        flat = jnp.pad(flat, (0, padded_n - n))
    x2d = flat.reshape(rows, _LANE)

    # Tile rows: big tile, but keep >=2 grid steps on non-tiny inputs so the
    # "parallel" grid axis can be sharded across v7x's two TensorCores.
    br = min(block_rows, rows)
    if rows > sublane:
        half = -(-rows // 2)                     # ceil(rows / 2)
        half = -(-half // sublane) * sublane     # round up to sublane multiple
        br = min(br, half)
    br = max(sublane, (br // sublane) * sublane)

    grid = pl.cdiv(rows, br)                     # ragged last block is masked

    out2d = pl.pallas_call(
        _swish_kernel,
        out_shape=jax.ShapeDtypeStruct((rows, _LANE), orig_dtype),
        grid=(grid,),
        in_specs=[pl.BlockSpec((br, _LANE), lambda i: (i, 0))],
        out_specs=pl.BlockSpec((br, _LANE), lambda i: (i, 0)),
        input_output_aliases={0: 0},
        compiler_params=pltpu.CompilerParams(
            dimension_semantics=("parallel",)),
    )(x2d)

    out_flat = out2d.reshape(-1)
    if padded_n != n:
        out_flat = out_flat[:n]
    return out_flat.reshape(orig_shape)


if __name__ == "__main__":
    key = jax.random.PRNGKey(0)
    # Small NCHW activation tensor consistent with a conv-block activation.
    x = jax.random.normal(key, (2, 4, 16, 16), jnp.float32)

    out = jax.jit(swish)(x)
    jax.block_until_ready(out)

    ref = x * jax.nn.sigmoid(x)
    assert out.shape == x.shape
    assert out.dtype == x.dtype
    assert bool(jnp.all(jnp.isfinite(out)))
    assert bool(jnp.allclose(out, ref, atol=1e-6, rtol=1e-6))

    # Also exercise a shape that is NOT a multiple of 128 (masked last block path).
    x2 = jax.random.normal(jax.random.PRNGKey(1), (3, 5, 7, 11), jnp.float32)
    out2 = jax.jit(swish)(x2)
    jax.block_until_ready(out2)
    assert bool(jnp.allclose(out2, x2 * jax.nn.sigmoid(x2), atol=1e-6, rtol=1e-6))

    print("KERNEL_OK")
</pallas_src>

<mosaic_0001>
module attributes {stable_mosaic.version = 11 : i64} {
  func.func @_swish_kernel(%arg0: i32, %arg1: memref<8x128xf32, #tpu.memory_space<vmem>>, %arg2: memref<8x128xf32, #tpu.memory_space<vmem>>) attributes {dimension_semantics = [#tpu.dimension_semantics<parallel>], iteration_bounds = array<i64: 2>, scalar_prefetch = 0 : i64, scratch_operands = 0 : i64, tpu.core_type = #tpu.core_type<tc>, window_params = [{transform_indices = @transform_0, window_bounds = array<i64: 8, 128>}, {transform_indices = @transform_1, window_bounds = array<i64: 8, 128>}]} {
    %c0 = arith.constant 0 : index
    %c0_0 = arith.constant 0 : index
    %0 = vector.load %arg1[%c0, %c0_0] : memref<8x128xf32, #tpu.memory_space<vmem>>, vector<8x128xf32>
    %1 = arith.negf %0 : vector<8x128xf32>
    %2 = math.exp %1 : vector<8x128xf32>
    %cst = arith.constant 1.000000e+00 : f32
    %3 = vector.broadcast %cst : f32 to vector<8x128xf32>
    %4 = arith.addf %3, %2 : vector<8x128xf32>
    %5 = arith.divf %3, %4 : vector<8x128xf32>
    %6 = arith.mulf %0, %5 : vector<8x128xf32>
    %c0_1 = arith.constant 0 : index
    %c0_2 = arith.constant 0 : index
    %7 = vector.load %arg2[%c0_1, %c0_2] : memref<8x128xf32, #tpu.memory_space<vmem>>, vector<8x128xf32>
    tpu.vector_store %arg2[%c0_1, %c0_2], %6 {strides = array<i32>} : memref<8x128xf32, #tpu.memory_space<vmem>>, vector<8x128xf32>,
    return
  }
  func.func @transform_0(%arg0: i32) -> (i32, i32) {
    %c0_i32 = arith.constant 0 : i32
    %c0_i32_0 = arith.constant 0 : i32
    return %arg0, %c0_i32 : i32, i32
  }
  func.func @transform_1(%arg0: i32) -> (i32, i32) {
    %c0_i32 = arith.constant 0 : i32
    %c0_i32_0 = arith.constant 0 : i32
    return %arg0, %c0_i32 : i32, i32
  }
}

</mosaic_0001>

<llo_original>
// kernel: swish.1
$region0: #{swish.1}
  #allocation0 [shape = 'u32[]', space=smem, size = 0x4, offset = 0x4, fixed_abs, tag = 'smem constant byte address 0x4 - core index']
  #allocation1 [shape = 'u32[144,128]{1,0:T(1,128)}', space=vmem, size = 0x12000, scoped, tag = 'internal scratch']
  %s0 = inlined_call_operand.vmem [shape: f32[16,128], index: 0, kind: input, shape index: {}, may-alias: {0,1}]
  %s1 = inlined_call_operand.vmem [shape: f32[16,128], index: 1, kind: output, shape index: {}, may-alias: {0,1}]
  %s2 = sld [smem:[#allocation0]]
  $region37: #{swish.1} parent=0
    _
  %s4 = ssub.s32 1, %s2
  %s5 = scalar_select 0, %s4, %s2
  loop: start=0, step=1, limit=4
  $region2: #{swish.1} parent=0 // loop_pre_header
    _
  $region3: #{swish.1} parent=0 // loop_header
    %s7 = sphi 0, %s11
    %p8 = scmp.ge.s32.totalorder %s7, 4
    %s17 = sphi 0, %s19
    %s20 = sphi 0, %s17
    %s21 = sphi 0, %s20
    %s37 = sphi 0, %s21
    %s43 = sphi 0, %s45
    %s46 = sphi 0, %s43
    %s47 = sphi 0, %s46
    %s63 = sphi 0, %s47
  $region4: #{swish.1} parent=0 // loop_header_branch
    %10 = sbr.rel (%p8) target = $region8
  $region5: #{swish.1} parent=0 // loop_body
    %s12 = ssub.s32 %s7, 1
    %s13 = ssub.s32 %s7, 2
    %s14 = sadd.s32 %s7, 1
    %s15 = ssub.s32 %s7, %s14
    %p16 = scmp.eq.s32.totalorder %s15, 0
    %s18 = sadd.s32 %s17, 1
    %s19 = scalar_select %p16, %s17, %s18
    %p22 = pneg %p16
    %p23 = scmp.eq.s32.totalorder %s7, 1
    %p24 = por %p22, %p23
    %p25 = scmp.ne.s32.totalorder %s17, %s20
    %p26 = scmp.eq.s32.totalorder %s7, 0
    %p27 = por %p25, %p26
    %p28 = scmp.ne.s32.totalorder %s17, %s20
    %p29 = scmp.eq.s32.totalorder %s12, 1
    %p30 = por %p28, %p29
    %p31 = scmp.ne.s32.totalorder %s20, %s21
    %p32 = scmp.eq.s32.totalorder %s12, 0
    %p33 = por %p31, %p32
    %p34 = scmp.ne.s32.totalorder %s20, %s21
    %p35 = scmp.eq.s32.totalorder %s13, 1
    %p36 = por %p34, %p35
    %p38 = scmp.ne.s32.totalorder %s21, %s37
    %p39 = scmp.eq.s32.totalorder %s13, 0
    %p40 = por %p38, %p39
    %s41 = ssub.s32 %s7, %s14
    %p42 = scmp.eq.s32.totalorder %s41, 0
    %s44 = sadd.s32 %s43, 1
    %s45 = scalar_select %p42, %s43, %s44
    %p48 = pneg %p42
    %p49 = scmp.eq.s32.totalorder %s7, 1
    %p50 = por %p48, %p49
    %p51 = scmp.ne.s32.totalorder %s43, %s46
    %p52 = scmp.eq.s32.totalorder %s7, 0
    %p53 = por %p51, %p52
    %p54 = scmp.ne.s32.totalorder %s43, %s46
    %p55 = scmp.eq.s32.totalorder %s12, 1
    %p56 = por %p54, %p55
    %p57 = scmp.ne.s32.totalorder %s46, %s47
    %p58 = scmp.eq.s32.totalorder %s12, 0
    %p59 = por %p57, %p58
    %p60 = scmp.ne.s32.totalorder %s46, %s47
    %p61 = scmp.eq.s32.totalorder %s13, 1
    %p62 = por %p60, %p61
    %p64 = scmp.ne.s32.totalorder %s47, %s63
    %p65 = scmp.eq.s32.totalorder %s13, 0
    %p66 = por %p64, %p65
    %p67 = scmp.le.s32.totalorder 1, %s7
    %p68 = scmp.lt.s32.totalorder %s7, 3
    %p69 = pnand %p67, %p68
    %p70 = pneg %p69
    // Predicated region
    $region9: #{swish.1} parent=5 // pred_check
      _
    $region10: #{swish.1} parent=5 // pred_check_branch
      %72 = sbr.rel (%p69) target = $region12
    $region11: #{swish.1} parent=5 // pred_region
      %s73 = ssub.s32 %s7, 1
    $region12: #{swish.1} parent=5 // pred_fallthru
      _
    %p74 = scmp.lt.s32.totalorder %s7, 2
    // Predicated region
    $region13: #{swish.1} parent=5 // pred_check
      %p75 = pneg %p74
    $region14: #{swish.1} parent=5 // pred_check_branch
      %77 = sbr.rel (%p75) target = $region16
    $region15: #{swish.1} parent=5 // pred_region
      // Predicated region
      $region17: #{swish.1} parent=15 // pred_check
        %p78 = pneg %p27
      $region18: #{swish.1} parent=15 // pred_check_branch
        %80 = sbr.rel (%p78) target = $region20
      $region19: #{swish.1} parent=15 // pred_region
        %p81 = scmp.lt.s32.totalorder %s7, 1
        %s82 = scalar_select %p81, %s7, 1
        %s83 = smul.addr %s82, 8
        %s84 = scalar_lea.vmem %s0, %s83
      $region20: #{swish.1} parent=15 // pred_fallthru
        _
    $region16: #{swish.1} parent=5 // pred_fallthru
      _
    %p85 = scmp.le.s32.totalorder 1, %s7
    %p86 = scmp.lt.s32.totalorder %s7, 3
    %p87 = pnand %p85, %p86
    %p88 = pneg %p87
    // Predicated region
    $region21: #{swish.1} parent=5 // pred_check
      _
    $region22: #{swish.1} parent=5 // pred_check_branch
      %90 = sbr.rel (%p87) target = $region24
    $region23: #{swish.1} parent=5 // pred_region
      %s91 = ssub.s32 %s7, 1
      %p92 = scmp.lt.s32.totalorder %s12, 1
      %s93 = scalar_select %p92, %s12, 1
      %s94 = smul.addr %s93, 8
      %s95 = scalar_lea.vmem %s0, %s94
      %p96 = pneg %p33
      %p97 = pneg %p30
      %p98 = pneg %p59
      %p99 = pneg %p56
      %p100 = scmp.lt.s32.totalorder %s12, 1
      %s101 = scalar_select %p100, %s12, 1
      %s102 = smul.addr %s101, 8
      %s103 = scalar_lea.vmem %s1, %s102
      %p104 = scmp.lt.s32.totalorder %s12, 1
      %s105 = scalar_select %p104, %s12, 1
      %s106 = smul.addr %s105, 8
      %s107 = scalar_lea.vmem %s0, %s106
      %p108 = scmp.lt.s32.totalorder %s12, 1
      %s109 = scalar_select %p108, %s12, 1
      %s110 = smul.addr %s109, 8
      %s111 = scalar_lea.vmem %s1, %s110
      %v112 = vld [vmem:[%s107] sm:$0xff]
      %v113 = vxor.u32 %v112, 2147483648
      %v114 = vmul.f32 %v113, 1.442695
      %v115 = vpow.pop %v114
      %v116 = vadd.f32 %v115, 1.0
      %v117 = vrcp.pop %v116
      %v118 = vmul.f32 1.0, %v117
      %v119 = vmul.f32 %v112, %v118
      %120 = vst [vmem:[%s111] sm:$0xff] %v119
      %p121 = scmp.lt.s32.totalorder %s12, 1
      %s122 = scalar_select %p121, %s12, 1
      %s123 = smul.addr %s122, 8
      %s124 = scalar_lea.vmem %s1, %s123
      // Predicated region
      $region25: #{swish.1} parent=23 // pred_check
        %p125 = pneg %p56
      $region26: #{swish.1} parent=23 // pred_check_branch
        %127 = sbr.rel (%p125) target = $region28
      $region27: #{swish.1} parent=23 // pred_region
        _
      $region28: #{swish.1} parent=23 // pred_fallthru
        _
    $region24: #{swish.1} parent=5 // pred_fallthru
      _
    %p128 = scmp.le.s32.totalorder 2, %s7
    // Predicated region
    $region29: #{swish.1} parent=5 // pred_check
      %p129 = pneg %p128
    $region30: #{swish.1} parent=5 // pred_check_branch
      %131 = sbr.rel (%p129) target = $region32
    $region31: #{swish.1} parent=5 // pred_region
      %s132 = ssub.s32 %s7, 2
      // Predicated region
      $region33: #{swish.1} parent=31 // pred_check
        %p133 = pneg %p62
      $region34: #{swish.1} parent=31 // pred_check_branch
        %135 = sbr.rel (%p133) target = $region36
      $region35: #{swish.1} parent=31 // pred_region
        %p136 = scmp.lt.s32.totalorder %s13, 1
        %s137 = scalar_select %p136, %s13, 1
        %s138 = smul.addr %s137, 8
        %s139 = scalar_lea.vmem %s1, %s138
      $region36: #{swish.1} parent=31 // pred_fallthru
        _
    $region32: #{swish.1} parent=5 // pred_fallthru
      _
  $region6: #{swish.1} parent=0 // loop_footer
    %s11 = sadd.s32 1, %s7
  $region7: #{swish.1} parent=0 // loop_footer_branch
    %6 = sbr.rel target = $region3
  $region8: #{swish.1} parent=0 // loop_exit
    _

</llo_original>
